<compile_context>
chip_gen: v7x
topology: tpu7x:2x2x1
jax: 0.10.0
libtpu: 0.0.40
codegen_flags: <defaults>
</compile_context>

<pallas_src>
import functools

import jax
import jax.numpy as jnp
from jax.experimental import pallas as pl
from jax.experimental.pallas import tpu as pltpu


def _fused_affine_kernel(x_ref, w_ref, b_ref, o_ref):
    # One MXU matmul with f32 accumulation; bias add in f32 on the VPU,
    # single cast on the way out.
    acc = jnp.dot(x_ref[...], w_ref[...], preferred_element_type=jnp.float32)
    o_ref[...] = (acc + b_ref[...]).astype(o_ref.dtype)


def prepare_params(w_shared, b_shared, w_specific, b_specific,
                   w_fusion, b_fusion, *, compute_dtype=jnp.float32):
    """Fold the three Linear layers into one affine map.  Call ONCE at
    weight-load time (not per forward call).

    Weights are [in, out]; biases are [out].
    Returns (W_eff [d_in, F] in `compute_dtype`, b_eff [1, F] in f32)."""
    F = w_shared.shape[1]
    assert w_fusion.shape == (2 * F, F)
    w_sp = jnp.concatenate([w_shared, w_specific], axis=1)          # [d_in, 2F]
    b_sp = jnp.concatenate([b_shared, b_specific], axis=0)          # [2F]
    w_eff = jnp.dot(w_sp, w_fusion)                                 # [d_in, F]
    b_eff = (jnp.dot(b_sp, w_fusion) + b_fusion).reshape(1, F)      # [1, F]
    return w_eff.astype(compute_dtype), b_eff.astype(jnp.float32)


@functools.partial(jax.jit, static_argnames=("block_b",))
def basic_shared_specific(x, w_eff, b_eff, *, block_b=1024):
    """x: [B, V*F]; w_eff: [V*F, F]; b_eff: [1, F].  Returns [B, F] (f32)."""
    B, d_in = x.shape
    F = w_eff.shape[1]
    tb = min(block_b, B)

    # Match MXU operand dtype (no-op for f32; enables full-rate bf16 path).
    x = x.astype(w_eff.dtype)

    return pl.pallas_call(
        _fused_affine_kernel,
        out_shape=jax.ShapeDtypeStruct((B, F), jnp.float32),
        grid=(pl.cdiv(B, tb),),
        in_specs=[
            pl.BlockSpec((tb, d_in), lambda i: (i, 0)),   # x tile streams
            pl.BlockSpec((d_in, F), lambda i: (0, 0)),    # W_eff resident
            pl.BlockSpec((1, F), lambda i: (0, 0)),       # b_eff resident
        ],
        out_specs=pl.BlockSpec((tb, F), lambda i: (i, 0)),
        compiler_params=pltpu.CompilerParams(
            dimension_semantics=("parallel",)),           # megacore on v7x
    )(x, w_eff, b_eff)
    # TODO(synk): if F stays at 32 and many independent feature groups exist,
    # pack 4 groups so the output last dim is 128 (lane-dense stores).


def _reference(x, w_shared, b_shared, w_specific, b_specific, w_fusion, b_fusion):
    shared = x @ w_shared + b_shared
    specific = x @ w_specific + b_specific
    cat = jnp.concatenate([shared, specific], axis=-1)
    return cat @ w_fusion + b_fusion


if __name__ == "__main__":
    feature_dim = 32
    num_views = 4
    batch = 8
    d_in = num_views * feature_dim

    key = jax.random.PRNGKey(0)
    kx, k1, k2, k3, k4, k5, k6 = jax.random.split(key, 7)

    x = jax.random.normal(kx, (batch, d_in), dtype=jnp.float32)

    # Deterministic init mirroring nn.Linear's U(-1/sqrt(fan_in), 1/sqrt(fan_in)).
    def init_linear(kw, kb, fan_in, fan_out):
        bound = 1.0 / jnp.sqrt(jnp.float32(fan_in))
        w = jax.random.uniform(kw, (fan_in, fan_out), jnp.float32, -bound, bound)
        b = jax.random.uniform(kb, (fan_out,), jnp.float32, -bound, bound)
        return w, b

    w_shared, b_shared = init_linear(k1, k2, d_in, feature_dim)
    w_specific, b_specific = init_linear(k3, k4, d_in, feature_dim)
    w_fusion, b_fusion = init_linear(k5, k6, 2 * feature_dim, feature_dim)

    ref = _reference(x, w_shared, b_shared, w_specific, b_specific,
                     w_fusion, b_fusion)

    # --- f32 path: matches reference up to summation-order rounding. ---
    w_eff, b_eff = prepare_params(w_shared, b_shared, w_specific, b_specific,
                                  w_fusion, b_fusion,
                                  compute_dtype=jnp.float32)
    out = jax.block_until_ready(basic_shared_specific(x, w_eff, b_eff))
    assert out.shape == (batch, feature_dim)
    assert jnp.allclose(out, ref, atol=1e-4, rtol=1e-4), "f32 mismatch vs reference"

    # --- bf16-operand / f32-accumulation path (full-rate MXU on v6e/v7x). ---
    w_eff_bf, b_eff_bf = prepare_params(w_shared, b_shared, w_specific,
                                        b_specific, w_fusion, b_fusion,
                                        compute_dtype=jnp.bfloat16)
    out_bf = jax.block_until_ready(basic_shared_specific(x, w_eff_bf, b_eff_bf))
    assert out_bf.shape == (batch, feature_dim)
    assert jnp.allclose(out_bf, ref, atol=3e-2, rtol=3e-2), "bf16 mismatch vs reference"

    print("KERNEL_OK")
</pallas_src>

<mosaic_0001>
module attributes {stable_mosaic.version = 11 : i64} {
  func.func @_fused_affine_kernel(%arg0: i32, %arg1: memref<8x128xf32, #tpu.memory_space<vmem>>, %arg2: memref<128x32xf32, #tpu.memory_space<vmem>>, %arg3: memref<1x32xf32, #tpu.memory_space<vmem>>, %arg4: memref<8x32xf32, #tpu.memory_space<vmem>>) attributes {dimension_semantics = [#tpu.dimension_semantics<parallel>], iteration_bounds = array<i64: 1>, scalar_prefetch = 0 : i64, scratch_operands = 0 : i64, tpu.core_type = #tpu.core_type<tc>, window_params = [{transform_indices = @transform_0, window_bounds = array<i64: 8, 128>}, {pipeline_mode = #tpu.pipeline_mode<synchronous>, transform_indices = @transform_1, window_bounds = array<i64: 128, 32>}, {pipeline_mode = #tpu.pipeline_mode<synchronous>, transform_indices = @transform_2, window_bounds = array<i64: 1, 32>}, {transform_indices = @transform_3, window_bounds = array<i64: 8, 32>}]} {
    %c0 = arith.constant 0 : index
    %c0_0 = arith.constant 0 : index
    %0 = vector.load %arg1[%c0, %c0_0] : memref<8x128xf32, #tpu.memory_space<vmem>>, vector<8x128xf32>
    %c0_1 = arith.constant 0 : index
    %c0_2 = arith.constant 0 : index
    %1 = vector.load %arg2[%c0_1, %c0_2] : memref<128x32xf32, #tpu.memory_space<vmem>>, vector<128x32xf32>
    %cst = arith.constant dense<0.000000e+00> : vector<8x32xf32>
    %2 = tpu.matmul %0, %1, %cst {dimension_numbers = #tpu.dot_dimension_numbers<[1], [0], [0], [1], [0, 0, 1, 1], [], []>} : vector<8x128xf32>, vector<128x32xf32>, vector<8x32xf32> -> vector<8x32xf32>
    %c0_3 = arith.constant 0 : index
    %c0_4 = arith.constant 0 : index
    %3 = vector.load %arg3[%c0_3, %c0_4] : memref<1x32xf32, #tpu.memory_space<vmem>>, vector<1x32xf32>
    %4 = vector.broadcast %3 : vector<1x32xf32> to vector<8x32xf32>
    %5 = arith.addf %2, %4 : vector<8x32xf32>
    %c0_5 = arith.constant 0 : index
    %c0_6 = arith.constant 0 : index
    %6 = vector.load %arg4[%c0_5, %c0_6] : memref<8x32xf32, #tpu.memory_space<vmem>>, vector<8x32xf32>
    tpu.vector_store %arg4[%c0_5, %c0_6], %5 {strides = array<i32>} : memref<8x32xf32, #tpu.memory_space<vmem>>, vector<8x32xf32>,
    return
  }
  func.func @transform_0(%arg0: i32) -> (i32, i32) {
    %c0_i32 = arith.constant 0 : i32
    %c0_i32_0 = arith.constant 0 : i32
    return %arg0, %c0_i32 : i32, i32
  }
  func.func @transform_1(%arg0: i32) -> (i32, i32) {
    %c0_i32 = arith.constant 0 : i32
    %c0_i32_0 = arith.constant 0 : i32
    %c0_i32_1 = arith.constant 0 : i32
    return %c0_i32, %c0_i32_0 : i32, i32
  }
  func.func @transform_2(%arg0: i32) -> (i32, i32) {
    %c0_i32 = arith.constant 0 : i32
    %c0_i32_0 = arith.constant 0 : i32
    %c0_i32_1 = arith.constant 0 : i32
    return %c0_i32, %c0_i32_0 : i32, i32
  }
  func.func @transform_3(%arg0: i32) -> (i32, i32) {
    %c0_i32 = arith.constant 0 : i32
    %c0_i32_0 = arith.constant 0 : i32
    return %arg0, %c0_i32 : i32, i32
  }
}

</mosaic_0001>

<llo_original>
// kernel: basic_shared_specific.1
$region0: #{basic_shared_specific.1}
  #allocation0 [shape = 'u32[]', space=smem, size = 0x4, offset = 0x4, fixed_abs, tag = 'smem constant byte address 0x4 - core index']
  #allocation1 [shape = 'u32[144,128]{1,0:T(1,128)}', space=vmem, size = 0x12000, scoped, tag = 'internal scratch']
  %s0 = inlined_call_operand.vmem [shape: f32[8,128], index: 0, kind: input, shape index: {}]
  %s1 = inlined_call_operand.vmem [shape: f32[128,32], index: 1, kind: input, shape index: {}]
  %s2 = inlined_call_operand.vmem [shape: f32[1,32], index: 2, kind: input, shape index: {}]
  %s3 = inlined_call_operand.hbm [shape: f32[8,32], index: 3, kind: output, shape index: {}]
  %s4 = sld [smem:[#allocation0]]
  $region22: #{basic_shared_specific.1} parent=0
    _
  %s6 = ssub.s32 1, %s4
  %s7 = scalar_select 0, %s6, %s4
  $region1: #{basic_shared_specific.1} parent=0
    #allocation2 [shape = 'u8[4096]{0}', space=vmem, size = 0x1000, scoped, tag = 'output window, operand 0, single buffered']
    #allocation3 [shape = 's32[1]{0}', space=sflag, size = 0x4, scoped, tag = 'scoped memory for basic_shared_specific.1']
    %8 = vsyncpa [#allocation3], 0
    // Predicated region
    $region2: #{basic_shared_specific.1} parent=1 // pred_check
      _
    $region3: #{basic_shared_specific.1} parent=1 // pred_check_branch
      %10 = sbr.rel (0) target = $region5
    $region4: #{basic_shared_specific.1} parent=1 // pred_region
      _
    $region5: #{basic_shared_specific.1} parent=1 // pred_fallthru
      _
    // Predicated region
    $region6: #{basic_shared_specific.1} parent=1 // pred_check
      _
    $region7: #{basic_shared_specific.1} parent=1 // pred_check_branch
      %12 = sbr.rel (0) target = $region9
    $region8: #{basic_shared_specific.1} parent=1 // pred_region
      _
    $region9: #{basic_shared_specific.1} parent=1 // pred_fallthru
      _
    // Predicated region
    $region10: #{basic_shared_specific.1} parent=1 // pred_check
      _
    $region11: #{basic_shared_specific.1} parent=1 // pred_check_branch
      %14 = sbr.rel (0) target = $region13
    $region12: #{basic_shared_specific.1} parent=1 // pred_region
      _
    $region13: #{basic_shared_specific.1} parent=1 // pred_fallthru
      _
    %v15 = vld [vmem:[%s0] sm:$0xff]
    %v16 = vld [vmem:[%s1] sm:$0xff]
    %v17 = vld [vmem:[%s1 + $0x8] sm:$0xff]
    %v18 = vld [vmem:[%s1 + $0x10] sm:$0xff]
    %v19 = vld [vmem:[%s1 + $0x18] sm:$0xff]
    %v20 = vld [vmem:[%s1 + $0x20] sm:$0xff]
    %v21 = vld [vmem:[%s1 + $0x28] sm:$0xff]
    %v22 = vld [vmem:[%s1 + $0x30] sm:$0xff]
    %v23 = vld [vmem:[%s1 + $0x38] sm:$0xff]
    %v24 = vld [vmem:[%s1 + $0x40] sm:$0xff]
    %v25 = vld [vmem:[%s1 + $0x48] sm:$0xff]
    %v26 = vld [vmem:[%s1 + $0x50] sm:$0xff]
    %v27 = vld [vmem:[%s1 + $0x58] sm:$0xff]
    %v28 = vld [vmem:[%s1 + $0x60] sm:$0xff]
    %v29 = vld [vmem:[%s1 + $0x68] sm:$0xff]
    %v30 = vld [vmem:[%s1 + $0x70] sm:$0xff]
    %v31 = vld [vmem:[%s1 + $0x78] sm:$0xff]
    %v32 = vld [vmem:[%s2] sm:$0x1]
    %v34 = vlaneseq
    %v35 = vshrl.u32 %v34, 7
    %v36 = vsub.s32 0, %v35
    %v37 = vrot.slane %v32, %v36
    %39 = vmatprep.subr.mxu0 0.0
    %40 = vmatpush1.msra.mxu0 %v16
    %41 = vmatprep.subr.mxu0 0.0
    %42 = vmatpush1.msra.mxu0 %v17
    %43 = vmatprep.subr.mxu0 0.0
    %44 = vmatpush1.msra.mxu0 %v18
    %45 = vmatprep.subr.mxu0 0.0
    %46 = vmatpush1.msra.mxu0 %v19
    %47 = vmatprep.subr.mxu0 0.0
    %48 = vmatpush1.msra.mxu0 %v20
    %49 = vmatprep.subr.mxu0 0.0
    %50 = vmatpush1.msra.mxu0 %v21
    %51 = vmatprep.subr.mxu0 0.0
    %52 = vmatpush1.msra.mxu0 %v22
    %53 = vmatprep.subr.mxu0 0.0
    %54 = vmatpush1.msra.mxu0 %v23
    %55 = vmatprep.subr.mxu0 0.0
    %56 = vmatpush1.msra.mxu0 %v24
    %57 = vmatprep.subr.mxu0 0.0
    %58 = vmatpush1.msra.mxu0 %v25
    %59 = vmatprep.subr.mxu0 0.0
    %60 = vmatpush1.msra.mxu0 %v26
    %61 = vmatprep.subr.mxu0 0.0
    %62 = vmatpush1.msra.mxu0 %v27
    %63 = vmatprep.subr.mxu0 0.0
    %64 = vmatpush1.msra.mxu0 %v28
    %65 = vmatprep.subr.mxu0 0.0
    %66 = vmatpush1.msra.mxu0 %v29
    %67 = vmatprep.subr.mxu0 0.0
    %68 = vmatpush1.msra.mxu0 %v30
    %69 = vmatprep.subr.mxu0 0.0
    %70 = vmatpush1.msra.mxu0 %v31
    %71 = vmatprep.subr.mxu0 0.0
    %72 = vmatpush1.msra.mxu0 0.0
    %73 = vmatprep.subr.mxu0 0.0
    %74 = vmatpush1.msra.mxu0 0.0
    %75 = vmatprep.subr.mxu0 0.0
    %76 = vmatpush1.msra.mxu0 0.0
    %77 = vmatprep.subr.mxu0 0.0
    %78 = vmatpush1.msra.mxu0 0.0
    %79 = vmatprep.subr.mxu0 0.0
    %80 = vmatpush1.msra.mxu0 0.0
    %81 = vmatprep.subr.mxu0 0.0
    %82 = vmatpush1.msra.mxu0 0.0
    %83 = vmatprep.subr.mxu0 0.0
    %84 = vmatpush1.msra.mxu0 0.0
    %85 = vmatprep.subr.mxu0 0.0
    %86 = vmatpush1.msra.mxu0 0.0
    %87 = vmatprep.subr.mxu0 0.0
    %88 = vmatpush1.msra.mxu0 0.0
    %89 = vmatprep.subr.mxu0 0.0
    %90 = vmatpush1.msra.mxu0 0.0
    %91 = vmatprep.subr.mxu0 0.0
    %92 = vmatpush1.msra.mxu0 0.0
    %93 = vmatprep.subr.mxu0 0.0
    %94 = vmatpush1.msra.mxu0 0.0
    %95 = vmatprep.subr.mxu0 0.0
    %96 = vmatpush1.msra.mxu0 0.0
    %97 = vmatprep.subr.mxu0 0.0
    %98 = vmatpush1.msra.mxu0 0.0
    %99 = vmatprep.subr.mxu0 0.0
    %100 = vmatpush1.msra.mxu0 0.0
    %101 = vmatprep.subr.mxu0 0.0
    %102 = vmatpush1.msra.mxu0 0.0
    %103 = vmatprep.mubr.f32.mxu0 0.0
    %104 = vmatmul.mubr.f32.gmra.mrb[0].mxu0 %v15
    %v105 = vpop.f32.mrb[0].mxu0
    %v106 = vadd.f32 %v37, %v105
    %v107 = vpop.f32.mrb[0].mxu0
    %108 = vdwg.mxu0
    %vm109 = vcmask 261120
    %110 = vst.msk [vmem:[#allocation2] sm:$0xff] %vm109, %v106
    // Predicated region
    $region14: #{basic_shared_specific.1} parent=1 // pred_check
      _
    $region15: #{basic_shared_specific.1} parent=1 // pred_check_branch
      %112 = sbr.rel (0) target = $region17
    $region16: #{basic_shared_specific.1} parent=1 // pred_region
      %s114 = ssub.s32 128, 128
      %115 = vsyncadd [#allocation3], %s114
      %s117 = sshll.u32 [#allocation2], 4
      %s118 = int_to_ptr.vmem [resolvable:$true] %s117
      %120 = dma.vmem_to_hbm [thread:$0]  %s118, 128, %s3, [#allocation3]
    $region17: #{basic_shared_specific.1} parent=1 // pred_fallthru
      _
    // Predicated region
    $region18: #{basic_shared_specific.1} parent=1 // pred_check
      _
    $region19: #{basic_shared_specific.1} parent=1 // pred_check_branch
      %122 = sbr.rel (0) target = $region21
    $region20: #{basic_shared_specific.1} parent=1 // pred_region
      %123 = dma.done [#allocation3], 128
    $region21: #{basic_shared_specific.1} parent=1 // pred_fallthru
      _
    %124 = vsyncpa [#allocation3], 1

</llo_original>
